<compile_context>
chip_gen: v5e
topology: v5e:2x2
jax: 0.10.0
libtpu: 0.0.40
codegen_flags: <defaults>
</compile_context>

<pallas_src>
import functools

import jax
import jax.numpy as jnp
from jax.experimental import pallas as pl
from jax.experimental.pallas import tpu as pltpu


def _round_up(n, m):
    return ((n + m - 1) // m) * m


def _fusion_head_kernel(x_ref, w_ref, b_ref, o_ref, *, num_pooled, inv_p):
    """One (batch-tile, class-tile) grid step.

    x_ref: (TB, P_blk, D) -- raw tokens; only the first `num_pooled` are summed.
    w_ref: (D, TC)        -- pre-transposed, lane-dense weight tile.
    b_ref: (1, TC)        -- lane-dense bias tile.
    o_ref: (TB, TC)
    """
    # Mean over the pooled tokens, accumulated in f32 with plain VPU adds on
    # (TB, D) slices: no (TB, P, D) f32 temp, no cross-sublane reduce, and the
    # sublane-padding tokens (p >= num_pooled) are never touched.
    pooled = x_ref[:, 0, :].astype(jnp.float32)
    for p in range(1, num_pooled):
        pooled = pooled + x_ref[:, p, :].astype(jnp.float32)
    pooled = pooled * inv_p

    w = w_ref[...]
    if w.dtype != jnp.float32:
        # Feed the MXU in the weight's dtype (bf16 stays bf16); only the
        # pooling needed f32.  The matmul still accumulates in f32.
        pooled = pooled.astype(w.dtype)

    out = jnp.dot(pooled, w, preferred_element_type=jnp.float32)
    out = out + b_ref[...]                       # promoted to f32
    o_ref[...] = out.astype(o_ref.dtype)


def prepare_fusion_head_params(weight, bias):
    """Hoisted parameter prep (do once at param time, not per forward call).

    weight: (C, D) nn.Linear layout, bias: (C,).
    Returns w_t (D, C_pad) and b_pad (1, C_pad) with C_pad a multiple of 128
    (lane-dense output -> unmasked stores; zero-padded columns are inert).
    """
    C, D = weight.shape
    C_pad = _round_up(C, 128)
    w_t = jnp.zeros((D, C_pad), weight.dtype).at[:, :C].set(weight.T)
    b_pad = jnp.zeros((1, C_pad), bias.dtype).at[0, :C].set(bias)
    return w_t, b_pad


def adaptive_fusion_head(x, w_t, b_pad, num_prompts, num_classes):
    """x: (B, S, D), w_t: (D, C_pad), b_pad: (1, C_pad) -> (B, num_classes)."""
    B, S, D = x.shape
    D_w, C_pad = w_t.shape
    assert D_w == D
    P = num_prompts + 1
    assert P <= S, f"num_prompts + 1 = {P} exceeds sequence length {S}"

    x_itemsize = jnp.dtype(x.dtype).itemsize
    w_itemsize = jnp.dtype(w_t.dtype).itemsize

    # x block covers only the pooled tokens, rounded up to a legal sublane
    # multiple (or the full sequence if shorter); no wrapper slice/pad copies.
    P_blk = min(_round_up(P, 8), S)

    # --- class (lane) tiling: keep a single weight tile <= ~8 MiB so it fits
    # comfortably even in v7x's 64 MiB VMEM (32 MiB default scoped). ----------
    tc_cap = max(128, ((8 << 20) // max(D * w_itemsize, 1)) // 128 * 128)
    TC = min(C_pad, tc_cap)
    nc = pl.cdiv(C_pad, TC)

    # Grid-constant big weights don't need double-buffering: single-buffer them
    # so the VMEM goes to a bigger batch tile instead.
    big_const_weight = (nc == 1) and (D * TC * w_itemsize > (1 << 20))
    w_bufs = 1 if big_const_weight else 2

    # --- batch tiling under a conservative VMEM budget (fits v5e/v6e/v7x);
    # keep >= 2 batch steps when possible so the "parallel" B axis can shard
    # across v7x's two TensorCores. -------------------------------------------
    vmem_budget = 24 << 20
    fixed = w_bufs * (D * TC + TC) * w_itemsize
    per_row = (2 * P_blk * D * x_itemsize        # double-buffered x block
               + 2 * TC * x_itemsize             # double-buffered out block
               + (D + 2 * TC) * 4)               # f32 pooled + matmul temps
    rows_budget = max(8, (vmem_budget - fixed) // per_row)
    tb_target = 1024 if x_itemsize <= 2 else 512
    TB = min(tb_target, rows_budget)
    if B > 8:
        TB = min(TB, _round_up(pl.cdiv(B, 2), 8))
    TB = max(8, (TB // 8) * 8)
    if TB >= B:
        TB = B                                   # full-batch block (legal: == dim)
    nb = pl.cdiv(B, TB)

    if big_const_weight:
        w_spec = pl.BlockSpec((D, TC), lambda i, j: (0, j),
                              pipeline_mode=pl.Buffered(1))
        b_spec = pl.BlockSpec((1, TC), lambda i, j: (0, j),
                              pipeline_mode=pl.Buffered(1))
    else:
        w_spec = pl.BlockSpec((D, TC), lambda i, j: (0, j))
        b_spec = pl.BlockSpec((1, TC), lambda i, j: (0, j))

    footprint = (2 * TB * P_blk * D * x_itemsize
                 + w_bufs * (D * TC + TC) * w_itemsize
                 + 2 * TB * TC * x_itemsize
                 + TB * (D + TC) * 4)
    vmem_limit = int(min(48 << 20, max(32 << 20, 2 * footprint)))

    kernel = functools.partial(_fusion_head_kernel, num_pooled=P, inv_p=1.0 / P)

    out = pl.pallas_call(
        kernel,
        out_shape=jax.ShapeDtypeStruct((B, C_pad), x.dtype),
        grid_spec=pltpu.PrefetchScalarGridSpec(
            num_scalar_prefetch=0,
            # C axis inner: x's block index is constant across it, so the x DMA
            # is skipped between consecutive C tiles of the same batch tile.
            grid=(nb, nc),
            in_specs=[
                pl.BlockSpec((TB, P_blk, D), lambda i, j: (i, 0, 0)),  # tokens
                w_spec,                                                # weight
                b_spec,                                                # bias
            ],
            out_specs=pl.BlockSpec((TB, TC), lambda i, j: (i, j)),
        ),
        compiler_params=pltpu.CompilerParams(
            dimension_semantics=("parallel", "parallel"),
            vmem_limit_bytes=vmem_limit,
        ),
    )(x, w_t, b_pad)

    # Drop the class-axis lane padding (batch needed no padding at all).
    return out[:, :num_classes]


if __name__ == "__main__":
    # Small, deterministic example consistent with the module's forward:
    #   x: (batch, seq, dim) with seq > num_prompts + 1
    B, S, D = 2, 8, 32
    num_prompts = 3
    num_classes = 10

    key = jax.random.PRNGKey(0)
    kx, kw, kb = jax.random.split(key, 3)

    x = jax.random.normal(kx, (B, S, D), dtype=jnp.float32)
    # nn.Linear-style deterministic init (uniform in +/- 1/sqrt(dim))
    bound = 1.0 / (D ** 0.5)
    weight = jax.random.uniform(kw, (num_classes, D), jnp.float32, -bound, bound)
    bias = jax.random.uniform(kb, (num_classes,), jnp.float32, -bound, bound)

    # Parameter prep hoisted out of the per-forward path.
    w_t, b_pad = prepare_fusion_head_params(weight, bias)

    out = adaptive_fusion_head(x, w_t, b_pad, num_prompts, num_classes)
    out = jax.block_until_ready(out)

    # Pure-JAX reference for sanity
    ref = jnp.mean(x[:, : num_prompts + 1, :], axis=1) @ weight.T + bias
    assert out.shape == (B, num_classes)
    assert jnp.allclose(out, ref, atol=1e-5, rtol=1e-5)

    print("KERNEL_OK")
</pallas_src>

<mosaic_0001>
module attributes {stable_mosaic.version = 11 : i64} {
  func.func @_fusion_head_kernel(%arg0: i32, %arg1: i32, %arg2: memref<2x8x32xf32, #tpu.memory_space<vmem>>, %arg3: memref<32x128xf32, #tpu.memory_space<vmem>>, %arg4: memref<1x128xf32, #tpu.memory_space<vmem>>, %arg5: memref<2x128xf32, #tpu.memory_space<vmem>>) attributes {dimension_semantics = [#tpu.dimension_semantics<parallel>, #tpu.dimension_semantics<parallel>], iteration_bounds = array<i64: 1, 1>, scalar_prefetch = 0 : i64, scratch_operands = 0 : i64, tpu.core_type = #tpu.core_type<tc>, window_params = [{transform_indices = @transform_0, window_bounds = array<i64: 2, 8, 32>}, {transform_indices = @transform_1, window_bounds = array<i64: 32, 128>}, {transform_indices = @transform_2, window_bounds = array<i64: 1, 128>}, {transform_indices = @transform_3, window_bounds = array<i64: 2, 128>}]} {
    %c0 = arith.constant 0 : index
    %c0_0 = arith.constant 0 : index
    %c0_1 = arith.constant 0 : index
    %0 = vector.load %arg2[%c0, %c0_0, %c0_1] : memref<2x8x32xf32, #tpu.memory_space<vmem>>, vector<2x1x32xf32>
    %1 = vector.shape_cast %0 : vector<2x1x32xf32> to vector<2x32xf32>
    %c0_2 = arith.constant 0 : index
    %c1 = arith.constant 1 : index
    %c0_3 = arith.constant 0 : index
    %2 = vector.load %arg2[%c0_2, %c1, %c0_3] : memref<2x8x32xf32, #tpu.memory_space<vmem>>, vector<2x1x32xf32>
    %3 = vector.shape_cast %2 : vector<2x1x32xf32> to vector<2x32xf32>
    %4 = arith.addf %1, %3 : vector<2x32xf32>
    %c0_4 = arith.constant 0 : index
    %c2 = arith.constant 2 : index
    %c0_5 = arith.constant 0 : index
    %5 = vector.load %arg2[%c0_4, %c2, %c0_5] : memref<2x8x32xf32, #tpu.memory_space<vmem>>, vector<2x1x32xf32>
    %6 = vector.shape_cast %5 : vector<2x1x32xf32> to vector<2x32xf32>
    %7 = arith.addf %4, %6 : vector<2x32xf32>
    %c0_6 = arith.constant 0 : index
    %c3 = arith.constant 3 : index
    %c0_7 = arith.constant 0 : index
    %8 = vector.load %arg2[%c0_6, %c3, %c0_7] : memref<2x8x32xf32, #tpu.memory_space<vmem>>, vector<2x1x32xf32>
    %9 = vector.shape_cast %8 : vector<2x1x32xf32> to vector<2x32xf32>
    %10 = arith.addf %7, %9 : vector<2x32xf32>
    %cst = arith.constant 2.500000e-01 : f32
    %11 = vector.broadcast %cst : f32 to vector<2x32xf32>
    %12 = arith.mulf %10, %11 : vector<2x32xf32>
    %c0_8 = arith.constant 0 : index
    %c0_9 = arith.constant 0 : index
    %13 = vector.load %arg3[%c0_8, %c0_9] : memref<32x128xf32, #tpu.memory_space<vmem>>, vector<32x128xf32>
    %cst_10 = arith.constant dense<0.000000e+00> : vector<2x128xf32>
    %14 = tpu.matmul %12, %13, %cst_10 {dimension_numbers = #tpu.dot_dimension_numbers<[1], [0], [0], [1], [0, 0, 1, 1], [], []>} : vector<2x32xf32>, vector<32x128xf32>, vector<2x128xf32> -> vector<2x128xf32>
    %c0_11 = arith.constant 0 : index
    %c0_12 = arith.constant 0 : index
    %15 = vector.load %arg4[%c0_11, %c0_12] : memref<1x128xf32, #tpu.memory_space<vmem>>, vector<1x128xf32>
    %16 = vector.broadcast %15 : vector<1x128xf32> to vector<2x128xf32>
    %17 = arith.addf %14, %16 : vector<2x128xf32>
    %c0_13 = arith.constant 0 : index
    %c0_14 = arith.constant 0 : index
    %18 = vector.load %arg5[%c0_13, %c0_14] : memref<2x128xf32, #tpu.memory_space<vmem>>, vector<2x128xf32>
    tpu.vector_store %arg5[%c0_13, %c0_14], %17 {strides = array<i32>} : memref<2x128xf32, #tpu.memory_space<vmem>>, vector<2x128xf32>,
    return
  }
  func.func @transform_0(%arg0: i32, %arg1: i32) -> (i32, i32, i32) {
    %c0_i32 = arith.constant 0 : i32
    %c0_i32_0 = arith.constant 0 : i32
    %c0_i32_1 = arith.constant 0 : i32
    return %arg0, %c0_i32, %c0_i32_0 : i32, i32, i32
  }
  func.func @transform_1(%arg0: i32, %arg1: i32) -> (i32, i32) {
    %c0_i32 = arith.constant 0 : i32
    %c0_i32_0 = arith.constant 0 : i32
    return %c0_i32, %arg1 : i32, i32
  }
  func.func @transform_2(%arg0: i32, %arg1: i32) -> (i32, i32) {
    %c0_i32 = arith.constant 0 : i32
    %c0_i32_0 = arith.constant 0 : i32
    return %c0_i32, %arg1 : i32, i32
  }
  func.func @transform_3(%arg0: i32, %arg1: i32) -> (i32, i32) {
    %c0_i32 = arith.constant 0 : i32
    return %arg0, %arg1 : i32, i32
  }
}

</mosaic_0001>

<llo_original>
// kernel: tpu_custom_call.1
$region0: #{tpu_custom_call.1}
  #allocation0 [shape = 'u32[]', space=smem, size = 0x4, offset = 0x4, fixed_abs, tag = 'smem constant byte address 0x4 - core index']
  #allocation1 [shape = 'u32[72,128]{1,0:T(1,128)}', space=vmem, size = 0x9000, scoped, tag = 'internal scratch']
  %s0 = inlined_call_operand.hbm [shape: f32[2,8,32], index: 0, kind: input, shape index: {}]
  %s1 = inlined_call_operand.hbm [shape: f32[32,128], index: 1, kind: input, shape index: {}]
  %s2 = inlined_call_operand.vmem [shape: f32[1,128], index: 2, kind: input, shape index: {}]
  %s3 = inlined_call_operand.hbm [shape: f32[2,128], index: 3, kind: output, shape index: {}]
  %s4 = sld [smem:[#allocation0]]
  $region30: #{tpu_custom_call.1} parent=0
    _
  %s6 = ssub.s32 1, %s4
  %s7 = scalar_select 0, %s6, %s4
  $region1: #{tpu_custom_call.1} parent=0
    #allocation2 [shape = 'u8[8192]{0}', space=vmem, size = 0x2000, scoped, tag = 'input window, operand 0, single buffered']
    #allocation3 [shape = 's32[1]{0}', space=sflag, size = 0x4, scoped, tag = 'scoped memory for tpu_custom_call.1']
    #allocation4 [shape = 's32[1]{0}', space=sflag, size = 0x4, scoped, tag = 'scoped memory for tpu_custom_call.1']
    #allocation5 [shape = 'u8[16384]{0}', space=vmem, size = 0x4000, scoped, tag = 'input window, operand 1, single buffered']
    #allocation6 [shape = 's32[1]{0}', space=sflag, size = 0x4, scoped, tag = 'scoped memory for tpu_custom_call.1']
    #allocation7 [shape = 'u8[1024]{0}', space=vmem, size = 0x400, scoped, tag = 'output window, operand 0, single buffered']
    %8 = vsyncpa [#allocation3], 0
    %9 = vsyncpa [#allocation6], 0
    %10 = vsyncpa [#allocation4], 0
    // Predicated region
    $region2: #{tpu_custom_call.1} parent=1 // pred_check
      _
    $region3: #{tpu_custom_call.1} parent=1 // pred_check_branch
      %12 = sbr.rel (0) target = $region5
    $region4: #{tpu_custom_call.1} parent=1 // pred_region
      %14 = vsyncadd [#allocation3], 0
      %s15 = sshll.u32 %s0, 4
      %s16 = int_to_ptr.hbm [resolvable:$true] %s15
      %s17 = sshll.u32 [#allocation2], 4
      %s18 = int_to_ptr.vmem [resolvable:$true] %s17
      %23 = dma.hbm_to_vmem [thread:$0]  %s16, 256, %s18, [#allocation3], 128, 128, 8
    $region5: #{tpu_custom_call.1} parent=1 // pred_fallthru
      _
    // Predicated region
    $region6: #{tpu_custom_call.1} parent=1 // pred_check
      _
    $region7: #{tpu_custom_call.1} parent=1 // pred_check_branch
      %25 = sbr.rel (0) target = $region9
    $region8: #{tpu_custom_call.1} parent=1 // pred_region
      %27 = vsyncadd [#allocation6], 0
      %s28 = sshll.u32 %s1, 4
      %s29 = int_to_ptr.hbm [resolvable:$true] %s28
      %s30 = sshll.u32 [#allocation5], 4
      %s31 = int_to_ptr.vmem [resolvable:$true] %s30
      %36 = dma.hbm_to_vmem [thread:$0]  %s29, 512, %s31, [#allocation6], 128, 128, 8
    $region9: #{tpu_custom_call.1} parent=1 // pred_fallthru
      _
    // Predicated region
    $region10: #{tpu_custom_call.1} parent=1 // pred_check
      _
    $region11: #{tpu_custom_call.1} parent=1 // pred_check_branch
      %38 = sbr.rel (0) target = $region13
    $region12: #{tpu_custom_call.1} parent=1 // pred_region
      _
    $region13: #{tpu_custom_call.1} parent=1 // pred_fallthru
      _
    // Predicated region
    $region14: #{tpu_custom_call.1} parent=1 // pred_check
      _
    $region15: #{tpu_custom_call.1} parent=1 // pred_check_branch
      %40 = sbr.rel (0) target = $region17
    $region16: #{tpu_custom_call.1} parent=1 // pred_region
      %42 = dma.done [#allocation3], 256
    $region17: #{tpu_custom_call.1} parent=1 // pred_fallthru
      _
    // Predicated region
    $region18: #{tpu_custom_call.1} parent=1 // pred_check
      _
    $region19: #{tpu_custom_call.1} parent=1 // pred_check_branch
      %44 = sbr.rel (0) target = $region21
    $region20: #{tpu_custom_call.1} parent=1 // pred_region
      %46 = dma.done [#allocation6], 512
    $region21: #{tpu_custom_call.1} parent=1 // pred_fallthru
      _
    %v47 = vld [vmem:[#allocation2] sm:$0x1]
    %v48 = vld [vmem:[#allocation2 + $0x8] sm:$0x1]
    %v49 = vld [vmem:[#allocation2 + $0x1] sm:$0x1]
    %v50 = vld [vmem:[#allocation2 + $0x9] sm:$0x1]
    %v51 = vadd.f32 %v47, %v49
    %v52 = vadd.f32 %v48, %v50
    %v53 = vld [vmem:[#allocation2 + $0x2] sm:$0x1]
    %v54 = vld [vmem:[#allocation2 + $0xa] sm:$0x1]
    %v55 = vadd.f32 %v51, %v53
    %v56 = vadd.f32 %v52, %v54
    %v57 = vld [vmem:[#allocation2 + $0x3] sm:$0x1]
    %v58 = vld [vmem:[#allocation2 + $0xb] sm:$0x1]
    %v59 = vadd.f32 %v55, %v57
    %v60 = vadd.f32 %v56, %v58
    %v61 = vmul.f32 %v59, 0.25
    %v62 = vmul.f32 %v60, 0.25
    %v63 = vld [vmem:[#allocation5] sm:$0xff]
    %v64 = vld [vmem:[#allocation5 + $0x8] sm:$0xff]
    %v65 = vld [vmem:[#allocation5 + $0x10] sm:$0xff]
    %v66 = vld [vmem:[#allocation5 + $0x18] sm:$0xff]
    %v67 = vld [vmem:[%s2] sm:$0x1]
    %v69 = vperm.slane %v67, 0
    %v73 = vrot.slane %v62, 7
    %vm74 = vcmask 1041409
    %v75 = vsel %vm74, %v73, %v61
    %vm76 = vcmask 261120
    %v77 = vsel %vm76, %v75, 0
    %79 = vmatpush.msra.mxu0 0.0
    %80 = vmatpush.msra.mxu0 0.0
    %81 = vmatpush.msra.mxu0 0.0
    %82 = vmatpush.msra.mxu0 0.0
    %83 = vmatpush.msra.mxu0 0.0
    %84 = vmatpush.msra.mxu0 0.0
    %85 = vmatpush.msra.mxu0 0.0
    %86 = vmatpush.msra.mxu0 0.0
    %87 = vmatpush.msra.mxu0 0.0
    %88 = vmatpush.msra.mxu0 0.0
    %89 = vmatpush.msra.mxu0 0.0
    %90 = vmatpush.msra.mxu0 0.0
    %91 = vmatpush.msra.mxu0 %v66
    %92 = vmatpush.msra.mxu0 %v65
    %93 = vmatpush.msra.mxu0 %v64
    %94 = vmatpush.msra.mxu0 %v63
    %95 = vmatmul.f32.gmra.mxu0 %v77
    %v96 = vpop.f32.mrf.mxu0
    %v97 = vadd.f32 %v69, %v96
    %98 = vdwg.mxu0
    %99 = vst [vmem:[#allocation7] sm:$0x3] %v97
    // Predicated region
    $region22: #{tpu_custom_call.1} parent=1 // pred_check
      _
    $region23: #{tpu_custom_call.1} parent=1 // pred_check_branch
      %101 = sbr.rel (0) target = $region25
    $region24: #{tpu_custom_call.1} parent=1 // pred_region
      %103 = vsyncadd [#allocation4], 0
      %s105 = sshll.u32 [#allocation7], 4
      %s106 = int_to_ptr.vmem [resolvable:$true] %s105
      %s107 = sshll.u32 %s3, 4
      %s108 = int_to_ptr.hbm [resolvable:$true] %s107
      %110 = dma.vmem_to_hbm [thread:$0]  %s106, 32, %s108, [#allocation4]
    $region25: #{tpu_custom_call.1} parent=1 // pred_fallthru
      _
    // Predicated region
    $region26: #{tpu_custom_call.1} parent=1 // pred_check
      _
    $region27: #{tpu_custom_call.1} parent=1 // pred_check_branch
      %112 = sbr.rel (0) target = $region29
    $region28: #{tpu_custom_call.1} parent=1 // pred_region
      %114 = dma.done [#allocation4], 32
    $region29: #{tpu_custom_call.1} parent=1 // pred_fallthru
      _
    %115 = vsyncpa [#allocation3], 1
    %116 = vsyncpa [#allocation6], 1
    %117 = vsyncpa [#allocation4], 1

</llo_original>
